<compile_context>
chip_gen: v6e
topology: v6e:2x2x1
jax: 0.10.0
libtpu: 0.0.40
codegen_flags: <defaults>
</compile_context>

<pallas_src>
import jax
import jax.numpy as jnp
from jax import lax
from jax.experimental import pallas as pl
from jax.experimental.pallas import tpu as pltpu

PAD = 128          # lane padding for every feature dim (embd/hidden/enc/target)
ROW_PAD = 16       # word rows padded to a multiple of 16 (bf16 sublane packing)
BN_EPS = 1e-5      # nn.BatchNorm1d default eps


def deepset_kernel(words_ref, seg_ref, w_ref, bb_ref, pred_ref):
    """bb_ref rows 0..5 = Linear biases, row 6 = BN gamma, row 7 = BN beta."""
    f32 = jnp.float32
    bf16 = jnp.bfloat16

    def linear(x_bf16, i):
        # static index / static slice on the packed stacks -> zero-cost views
        return (jnp.dot(x_bf16, w_ref[i], preferred_element_type=f32)
                + bb_ref[i:i + 1, :])

    # --- enc_net: Linear -> Tanh -> Linear -> Tanh -> Linear  (NW_pad rows) ---
    h = jnp.tanh(linear(words_ref[...], 0))
    h = jnp.tanh(linear(h.astype(bf16), 1))
    enc = linear(h.astype(bf16), 2)                       # (NW_pad, PAD) f32

    # --- per-pick sum over its words, as a 0/1 indicator matmul (MXU).
    # Padded word rows have zero indicator columns, so padding never leaks.
    codes = jnp.dot(seg_ref[...], enc.astype(bf16),
                    preferred_element_type=f32)           # (S, PAD) f32

    # --- BatchNorm1d, training mode: batch mean / biased variance, eps=1e-5 ---
    mean = jnp.mean(codes, axis=0, keepdims=True)
    var = jnp.mean((codes - mean) ** 2, axis=0, keepdims=True)
    normed = (codes - mean) * lax.rsqrt(var + BN_EPS)
    normed = normed * bb_ref[6:7, :] + bb_ref[7:8, :]     # gamma / beta

    # --- pred_net: Linear -> Tanh -> Linear -> Tanh -> Linear ---
    g = jnp.tanh(linear(normed.astype(bf16), 3))
    g = jnp.tanh(linear(g.astype(bf16), 4))
    pred_ref[...] = linear(g.astype(bf16), 5)             # (S, PAD) f32


def deepset_pred_forward(words_pad, seg, w_stack, bb_stack,
                         batch, alpha_iter, target_dim):
    nw_pad = words_pad.shape[0]
    n_samples = seg.shape[0]

    # advisory cost hint for the XLA scheduler (kernel is latency-bound)
    flops = 2 * (3 * nw_pad * PAD * PAD           # enc_net matmuls
                 + n_samples * nw_pad * PAD       # segment-sum matmul
                 + 3 * n_samples * PAD * PAD)     # pred_net matmuls
    transcendentals = 2 * nw_pad * PAD + 2 * n_samples * PAD
    bytes_accessed = int(words_pad.size * words_pad.dtype.itemsize
                         + seg.size * seg.dtype.itemsize
                         + w_stack.size * w_stack.dtype.itemsize
                         + bb_stack.size * bb_stack.dtype.itemsize
                         + n_samples * PAD * 4)

    vmem = pl.BlockSpec(memory_space=pltpu.MemorySpace.VMEM)
    pred_pad = pl.pallas_call(
        deepset_kernel,
        out_shape=jax.ShapeDtypeStruct((n_samples, PAD), jnp.float32),
        in_specs=[vmem] * 4,
        out_specs=vmem,
        cost_estimate=pl.CostEstimate(flops=int(flops),
                                      transcendentals=int(transcendentals),
                                      bytes_accessed=bytes_accessed),
    )(words_pad, seg, w_stack, bb_stack)
    # slice the valid lanes back out and reshape to (batch, alpha_iter, target)
    return pred_pad[:, :target_dim].reshape(batch, alpha_iter, target_dim)


def _linear_params(key, in_dim, out_dim):
    kw, kb = jax.random.split(key)
    bound = 1.0 / jnp.sqrt(in_dim)
    w = jax.random.uniform(kw, (in_dim, out_dim), jnp.float32, -bound, bound)
    b = jax.random.uniform(kb, (out_dim,), jnp.float32, -bound, bound)
    return w, b


if __name__ == "__main__":
    # --- problem sizes (small, consistent with the module) ---
    batch = 2
    alpha_iter = 2
    embd_dim = 32
    hidden_dim = 32
    enc_dim = 32
    target_dim = 4

    key = jax.random.PRNGKey(0)
    keys = jax.random.split(key, 16)

    # word_picks: list (batch) of lists (alpha_iter) of (flex, embd_dim) tensors
    lens = [[5, 7], [6, 9]]
    word_picks = []
    k = 0
    for b in range(batch):
        samples = []
        for a in range(alpha_iter):
            samples.append(0.1 * jax.random.normal(
                keys[k], (lens[b][a], embd_dim), jnp.float32))
            k += 1
        word_picks.append(samples)

    # nn.Linear params, stored pre-transposed as (in, out), PyTorch default init
    dims = [(embd_dim, hidden_dim), (hidden_dim, hidden_dim),
            (hidden_dim, enc_dim), (enc_dim, hidden_dim),
            (hidden_dim, hidden_dim), (hidden_dim, target_dim)]
    ws, bs = [], []
    for i, (din, dout) in enumerate(dims):
        w, b_ = _linear_params(keys[k + i], din, dout)
        ws.append(w)
        bs.append(b_)

    # ---- pack params: one bf16 weight stack + one (8,128) f32 bias/BN slab ----
    w_stack = jnp.zeros((6, PAD, PAD), jnp.float32)
    bb_stack = jnp.zeros((8, PAD), jnp.float32)
    for i, (din, dout) in enumerate(dims):
        w_stack = w_stack.at[i, :din, :dout].set(ws[i])
        bb_stack = bb_stack.at[i, :dout].set(bs[i])
    w_stack = w_stack.astype(jnp.bfloat16)       # bf16 MXU operands
    # BatchNorm1d affine params at init: gamma=1 (row 6), beta=0 (row 7).
    # Padded-lane beta MUST stay 0 so zero-padded feature lanes stay zero.
    bb_stack = bb_stack.at[6, :].set(1.0)

    # ---- flatten picks: word slab padded to a multiple of 16 rows + seg ----
    n_samples = batch * alpha_iter
    flat = [word_picks[b][a] for b in range(batch) for a in range(alpha_iter)]
    n_words = sum(x.shape[0] for x in flat)
    nw_pad = max(ROW_PAD, -(-n_words // ROW_PAD) * ROW_PAD)   # 27 -> 32 rows
    words_pad = jnp.zeros((nw_pad, PAD), jnp.float32)
    seg = jnp.zeros((n_samples, nw_pad), jnp.float32)
    off = 0
    for s, x in enumerate(flat):
        words_pad = words_pad.at[off:off + x.shape[0], :embd_dim].set(x)
        seg = seg.at[s, off:off + x.shape[0]].set(1.0)
        off += x.shape[0]
    words_pad = words_pad.astype(jnp.bfloat16)
    seg = seg.astype(jnp.bfloat16)               # 0/1 is exact in bf16

    # ---- run the Pallas kernel ----
    pred = deepset_pred_forward(words_pad, seg, w_stack, bb_stack,
                                batch, alpha_iter, target_dim)
    jax.block_until_ready(pred)

    # ---- plain-JAX reference (same bf16 MXU-operand precision, unpadded) ----
    def ref_forward():
        bf16 = jnp.bfloat16

        def lin(x, i):
            return (jnp.dot(x.astype(bf16), ws[i].astype(bf16),
                            preferred_element_type=jnp.float32) + bs[i])

        encs = []
        for bb in range(batch):
            for aa in range(alpha_iter):
                x = word_picks[bb][aa]
                h = jnp.tanh(lin(x, 0))
                h = jnp.tanh(lin(h, 1))
                enc = lin(h, 2)
                # kernel sums bf16-rounded enc values (via the indicator matmul)
                encs.append(jnp.sum(enc.astype(bf16).astype(jnp.float32),
                                    axis=0))
        codes = jnp.stack(encs)                               # (S, enc_dim)
        mean = jnp.mean(codes, axis=0, keepdims=True)
        var = jnp.mean((codes - mean) ** 2, axis=0, keepdims=True)
        normed = (codes - mean) * lax.rsqrt(var + BN_EPS)     # gamma=1, beta=0
        g = jnp.tanh(lin(normed, 3))
        g = jnp.tanh(lin(g, 4))
        return lin(g, 5).reshape(batch, alpha_iter, target_dim)

    pred_ref = ref_forward()
    jax.block_until_ready(pred_ref)

    assert pred.shape == (batch, alpha_iter, target_dim)
    assert jnp.allclose(pred, pred_ref, atol=2e-3, rtol=2e-3), (
        jnp.max(jnp.abs(pred - pred_ref)))

    print("KERNEL_OK")
</pallas_src>

<mosaic_0001>
module attributes {stable_mosaic.version = 11 : i64} {
  func.func @deepset_kernel(%arg0: memref<32x128xbf16, #tpu.memory_space<vmem>>, %arg1: memref<4x32xbf16, #tpu.memory_space<vmem>>, %arg2: memref<6x128x128xbf16, #tpu.memory_space<vmem>>, %arg3: memref<8x128xf32, #tpu.memory_space<vmem>>, %arg4: memref<4x128xf32, #tpu.memory_space<vmem>>) attributes {dimension_semantics = [], scalar_prefetch = 0 : i64, scratch_operands = 0 : i64, tpu.core_type = #tpu.core_type<tc>} {
    %c0 = arith.constant 0 : index
    %c0_0 = arith.constant 0 : index
    %0 = vector.load %arg0[%c0, %c0_0] : memref<32x128xbf16, #tpu.memory_space<vmem>>, vector<32x128xbf16>
    %c0_1 = arith.constant 0 : index
    %c0_2 = arith.constant 0 : index
    %c0_3 = arith.constant 0 : index
    %1 = vector.load %arg2[%c0_1, %c0_2, %c0_3] : memref<6x128x128xbf16, #tpu.memory_space<vmem>>, vector<1x128x128xbf16>
    %2 = vector.shape_cast %1 : vector<1x128x128xbf16> to vector<128x128xbf16>
    %cst = arith.constant dense<0.000000e+00> : vector<32x128xf32>
    %3 = tpu.matmul %0, %2, %cst {dimension_numbers = #tpu.dot_dimension_numbers<[1], [0], [0], [1], [0, 0, 1, 1], [], []>} : vector<32x128xbf16>, vector<128x128xbf16>, vector<32x128xf32> -> vector<32x128xf32>
    %c0_4 = arith.constant 0 : index
    %c0_5 = arith.constant 0 : index
    %4 = vector.load %arg3[%c0_4, %c0_5] : memref<8x128xf32, #tpu.memory_space<vmem>>, vector<1x128xf32>
    %5 = vector.broadcast %4 : vector<1x128xf32> to vector<32x128xf32>
    %6 = arith.addf %3, %5 : vector<32x128xf32>
    %7 = math.tanh %6 : vector<32x128xf32>
    %8 = arith.truncf %7 : vector<32x128xf32> to vector<32x128xbf16>
    %c1 = arith.constant 1 : index
    %c0_6 = arith.constant 0 : index
    %c0_7 = arith.constant 0 : index
    %9 = vector.load %arg2[%c1, %c0_6, %c0_7] : memref<6x128x128xbf16, #tpu.memory_space<vmem>>, vector<1x128x128xbf16>
    %10 = vector.shape_cast %9 : vector<1x128x128xbf16> to vector<128x128xbf16>
    %cst_8 = arith.constant dense<0.000000e+00> : vector<32x128xf32>
    %11 = tpu.matmul %8, %10, %cst_8 {dimension_numbers = #tpu.dot_dimension_numbers<[1], [0], [0], [1], [0, 0, 1, 1], [], []>} : vector<32x128xbf16>, vector<128x128xbf16>, vector<32x128xf32> -> vector<32x128xf32>
    %c1_9 = arith.constant 1 : index
    %c0_10 = arith.constant 0 : index
    %12 = vector.load %arg3[%c1_9, %c0_10] : memref<8x128xf32, #tpu.memory_space<vmem>>, vector<1x128xf32>
    %13 = vector.broadcast %12 : vector<1x128xf32> to vector<32x128xf32>
    %14 = arith.addf %11, %13 : vector<32x128xf32>
    %15 = math.tanh %14 : vector<32x128xf32>
    %16 = arith.truncf %15 : vector<32x128xf32> to vector<32x128xbf16>
    %c2 = arith.constant 2 : index
    %c0_11 = arith.constant 0 : index
    %c0_12 = arith.constant 0 : index
    %17 = vector.load %arg2[%c2, %c0_11, %c0_12] : memref<6x128x128xbf16, #tpu.memory_space<vmem>>, vector<1x128x128xbf16>
    %18 = vector.shape_cast %17 : vector<1x128x128xbf16> to vector<128x128xbf16>
    %cst_13 = arith.constant dense<0.000000e+00> : vector<32x128xf32>
    %19 = tpu.matmul %16, %18, %cst_13 {dimension_numbers = #tpu.dot_dimension_numbers<[1], [0], [0], [1], [0, 0, 1, 1], [], []>} : vector<32x128xbf16>, vector<128x128xbf16>, vector<32x128xf32> -> vector<32x128xf32>
    %c2_14 = arith.constant 2 : index
    %c0_15 = arith.constant 0 : index
    %20 = vector.load %arg3[%c2_14, %c0_15] : memref<8x128xf32, #tpu.memory_space<vmem>>, vector<1x128xf32>
    %21 = vector.broadcast %20 : vector<1x128xf32> to vector<32x128xf32>
    %22 = arith.addf %19, %21 : vector<32x128xf32>
    %c0_16 = arith.constant 0 : index
    %c0_17 = arith.constant 0 : index
    %23 = vector.load %arg1[%c0_16, %c0_17] : memref<4x32xbf16, #tpu.memory_space<vmem>>, vector<4x32xbf16>
    %24 = arith.truncf %22 : vector<32x128xf32> to vector<32x128xbf16>
    %cst_18 = arith.constant dense<0.000000e+00> : vector<4x128xf32>
    %25 = tpu.matmul %23, %24, %cst_18 {dimension_numbers = #tpu.dot_dimension_numbers<[1], [0], [0], [1], [0, 0, 1, 1], [], []>} : vector<4x32xbf16>, vector<32x128xbf16>, vector<4x128xf32> -> vector<4x128xf32>
    %cst_19 = arith.constant dense<0.000000e+00> : vector<128xf32>
    %26 = vector.multi_reduction <add>, %25, %cst_19 [0] : vector<4x128xf32> to vector<128xf32>
    %27 = vector.shape_cast %26 : vector<128xf32> to vector<1x128xf32>
    %cst_20 = arith.constant 4.000000e+00 : f32
    %28 = vector.broadcast %cst_20 : f32 to vector<1x128xf32>
    %29 = arith.divf %27, %28 : vector<1x128xf32>
    %30 = vector.broadcast %29 : vector<1x128xf32> to vector<4x128xf32>
    %31 = arith.subf %25, %30 : vector<4x128xf32>
    %32 = arith.mulf %31, %31 : vector<4x128xf32>
    %cst_21 = arith.constant dense<0.000000e+00> : vector<128xf32>
    %33 = vector.multi_reduction <add>, %32, %cst_21 [0] : vector<4x128xf32> to vector<128xf32>
    %34 = vector.shape_cast %33 : vector<128xf32> to vector<1x128xf32>
    %cst_22 = arith.constant 4.000000e+00 : f32
    %35 = vector.broadcast %cst_22 : f32 to vector<1x128xf32>
    %36 = arith.divf %34, %35 : vector<1x128xf32>
    %37 = vector.broadcast %29 : vector<1x128xf32> to vector<4x128xf32>
    %38 = arith.subf %25, %37 : vector<4x128xf32>
    %cst_23 = arith.constant 9.99999974E-6 : f32
    %39 = vector.broadcast %cst_23 : f32 to vector<1x128xf32>
    %40 = arith.addf %36, %39 : vector<1x128xf32>
    %41 = math.rsqrt %40 : vector<1x128xf32>
    %42 = vector.broadcast %41 : vector<1x128xf32> to vector<4x128xf32>
    %43 = arith.mulf %38, %42 : vector<4x128xf32>
    %c6 = arith.constant 6 : index
    %c0_24 = arith.constant 0 : index
    %44 = vector.load %arg3[%c6, %c0_24] : memref<8x128xf32, #tpu.memory_space<vmem>>, vector<1x128xf32>
    %45 = vector.broadcast %44 : vector<1x128xf32> to vector<4x128xf32>
    %46 = arith.mulf %43, %45 : vector<4x128xf32>
    %c7 = arith.constant 7 : index
    %c0_25 = arith.constant 0 : index
    %47 = vector.load %arg3[%c7, %c0_25] : memref<8x128xf32, #tpu.memory_space<vmem>>, vector<1x128xf32>
    %48 = vector.broadcast %47 : vector<1x128xf32> to vector<4x128xf32>
    %49 = arith.addf %46, %48 : vector<4x128xf32>
    %50 = arith.truncf %49 : vector<4x128xf32> to vector<4x128xbf16>
    %c3 = arith.constant 3 : index
    %c0_26 = arith.constant 0 : index
    %c0_27 = arith.constant 0 : index
    %51 = vector.load %arg2[%c3, %c0_26, %c0_27] : memref<6x128x128xbf16, #tpu.memory_space<vmem>>, vector<1x128x128xbf16>
    %52 = vector.shape_cast %51 : vector<1x128x128xbf16> to vector<128x128xbf16>
    %cst_28 = arith.constant dense<0.000000e+00> : vector<4x128xf32>
    %53 = tpu.matmul %50, %52, %cst_28 {dimension_numbers = #tpu.dot_dimension_numbers<[1], [0], [0], [1], [0, 0, 1, 1], [], []>} : vector<4x128xbf16>, vector<128x128xbf16>, vector<4x128xf32> -> vector<4x128xf32>
    %c3_29 = arith.constant 3 : index
    %c0_30 = arith.constant 0 : index
    %54 = vector.load %arg3[%c3_29, %c0_30] : memref<8x128xf32, #tpu.memory_space<vmem>>, vector<1x128xf32>
    %55 = vector.broadcast %54 : vector<1x128xf32> to vector<4x128xf32>
    %56 = arith.addf %53, %55 : vector<4x128xf32>
    %57 = math.tanh %56 : vector<4x128xf32>
    %58 = arith.truncf %57 : vector<4x128xf32> to vector<4x128xbf16>
    %c4 = arith.constant 4 : index
    %c0_31 = arith.constant 0 : index
    %c0_32 = arith.constant 0 : index
    %59 = vector.load %arg2[%c4, %c0_31, %c0_32] : memref<6x128x128xbf16, #tpu.memory_space<vmem>>, vector<1x128x128xbf16>
    %60 = vector.shape_cast %59 : vector<1x128x128xbf16> to vector<128x128xbf16>
    %cst_33 = arith.constant dense<0.000000e+00> : vector<4x128xf32>
    %61 = tpu.matmul %58, %60, %cst_33 {dimension_numbers = #tpu.dot_dimension_numbers<[1], [0], [0], [1], [0, 0, 1, 1], [], []>} : vector<4x128xbf16>, vector<128x128xbf16>, vector<4x128xf32> -> vector<4x128xf32>
    %c4_34 = arith.constant 4 : index
    %c0_35 = arith.constant 0 : index
    %62 = vector.load %arg3[%c4_34, %c0_35] : memref<8x128xf32, #tpu.memory_space<vmem>>, vector<1x128xf32>
    %63 = vector.broadcast %62 : vector<1x128xf32> to vector<4x128xf32>
    %64 = arith.addf %61, %63 : vector<4x128xf32>
    %65 = math.tanh %64 : vector<4x128xf32>
    %66 = arith.truncf %65 : vector<4x128xf32> to vector<4x128xbf16>
    %c5 = arith.constant 5 : index
    %c0_36 = arith.constant 0 : index
    %c0_37 = arith.constant 0 : index
    %67 = vector.load %arg2[%c5, %c0_36, %c0_37] : memref<6x128x128xbf16, #tpu.memory_space<vmem>>, vector<1x128x128xbf16>
    %68 = vector.shape_cast %67 : vector<1x128x128xbf16> to vector<128x128xbf16>
    %cst_38 = arith.constant dense<0.000000e+00> : vector<4x128xf32>
    %69 = tpu.matmul %66, %68, %cst_38 {dimension_numbers = #tpu.dot_dimension_numbers<[1], [0], [0], [1], [0, 0, 1, 1], [], []>} : vector<4x128xbf16>, vector<128x128xbf16>, vector<4x128xf32> -> vector<4x128xf32>
    %c5_39 = arith.constant 5 : index
    %c0_40 = arith.constant 0 : index
    %70 = vector.load %arg3[%c5_39, %c0_40] : memref<8x128xf32, #tpu.memory_space<vmem>>, vector<1x128xf32>
    %71 = vector.broadcast %70 : vector<1x128xf32> to vector<4x128xf32>
    %72 = arith.addf %69, %71 : vector<4x128xf32>
    %c0_41 = arith.constant 0 : index
    %c0_42 = arith.constant 0 : index
    %73 = vector.load %arg4[%c0_41, %c0_42] : memref<4x128xf32, #tpu.memory_space<vmem>>, vector<4x128xf32>
    tpu.vector_store %arg4[%c0_41, %c0_42], %72 {strides = array<i32>} : memref<4x128xf32, #tpu.memory_space<vmem>>, vector<4x128xf32>,
    return
  }
}

</mosaic_0001>

<llo_original>
// kernel: tpu_custom_call.1
$region0: #{tpu_custom_call.1}
  #allocation0 [shape = 'u32[]', space=smem, size = 0x4, offset = 0x4, fixed_abs, tag = 'smem constant byte address 0x4 - core index']
  #allocation1 [shape = 'u32[144,128]{1,0:T(1,128)}', space=vmem, size = 0x12000, scoped, tag = 'internal scratch']
  %s0 = inlined_call_operand.hbm [shape: bf16[32,128], index: 0, kind: input, shape index: {}]
  %s1 = inlined_call_operand.hbm [shape: bf16[4,32], index: 1, kind: input, shape index: {}]
  %s2 = inlined_call_operand.hbm [shape: bf16[6,128,128], index: 2, kind: input, shape index: {}]
  %s3 = inlined_call_operand.hbm [shape: f32[8,128], index: 3, kind: input, shape index: {}]
  %s4 = inlined_call_operand.hbm [shape: f32[4,128], index: 4, kind: output, shape index: {}]
  %s5 = sld [smem:[#allocation0]]
  $region42: #{tpu_custom_call.1} parent=0
    _
  %s7 = ssub.s32 1, %s5
  %s8 = scalar_select 0, %s7, %s5
  $region1: #{tpu_custom_call.1} parent=0
    #allocation2 [shape = 'u8[8192]{0}', space=vmem, size = 0x2000, scoped, tag = 'input window, operand 0, single buffered']
    #allocation3 [shape = 's32[1]{0}', space=sflag, size = 0x4, scoped, tag = 'scoped memory for tpu_custom_call.1']
    #allocation4 [shape = 's32[1]{0}', space=sflag, size = 0x4, scoped, tag = 'scoped memory for tpu_custom_call.1']
    #allocation5 [shape = 'u8[1024]{0}', space=vmem, size = 0x400, scoped, tag = 'input window, operand 1, single buffered']
    #allocation6 [shape = 's32[1]{0}', space=sflag, size = 0x4, scoped, tag = 'scoped memory for tpu_custom_call.1']
    #allocation7 [shape = 'u8[196608]{0}', space=vmem, size = 0x30000, scoped, tag = 'input window, operand 2, single buffered']
    #allocation8 [shape = 'u8[4096]{0}', space=vmem, size = 0x1000, scoped, tag = 'input window, operand 3, single buffered']
    #allocation9 [shape = 's32[1]{0}', space=sflag, size = 0x4, scoped, tag = 'scoped memory for tpu_custom_call.1']
    #allocation10 [shape = 'u8[2048]{0}', space=vmem, size = 0x800, scoped, tag = 'output window, operand 0, single buffered']
    %9 = vsyncpa [#allocation3], 0
    %10 = vsyncpa [#allocation6], 0
    %11 = vsyncpa [#allocation9], 0
    %12 = vsyncpa [#allocation4], 0
    // Predicated region
    $region2: #{tpu_custom_call.1} parent=1 // pred_check
      _
    $region3: #{tpu_custom_call.1} parent=1 // pred_check_branch
      %14 = sbr.rel (0) target = $region5
    $region4: #{tpu_custom_call.1} parent=1 // pred_region
      %s16 = ssub.s32 256, 256
      %17 = vsyncadd [#allocation3], %s16
      %s18 = sshll.u32 [#allocation2], 4
      %s19 = int_to_ptr.vmem [resolvable:$true] %s18
      %24 = dma.hbm_to_vmem [thread:$0]  %s0, 256, %s19, [#allocation3], 64, 64, 4
    $region5: #{tpu_custom_call.1} parent=1 // pred_fallthru
      _
    // Predicated region
    $region6: #{tpu_custom_call.1} parent=1 // pred_check
      _
    $region7: #{tpu_custom_call.1} parent=1 // pred_check_branch
      %26 = sbr.rel (0) target = $region9
    $region8: #{tpu_custom_call.1} parent=1 // pred_region
      %s28 = ssub.s32 32, 32
      %29 = vsyncadd [#allocation6], %s28
      %s31 = sshll.u32 [#allocation5], 4
      %s32 = int_to_ptr.vmem [resolvable:$true] %s31
      %34 = dma.hbm_to_vmem [thread:$0]  %s1, 32, %s32, [#allocation6]
    $region9: #{tpu_custom_call.1} parent=1 // pred_fallthru
      _
    // Predicated region
    $region10: #{tpu_custom_call.1} parent=1 // pred_check
      _
    $region11: #{tpu_custom_call.1} parent=1 // pred_check_branch
      %36 = sbr.rel (0) target = $region13
    $region12: #{tpu_custom_call.1} parent=1 // pred_region
      %s38 = ssub.s32 6144, 6144
      %39 = vsyncadd [#allocation6], %s38
      %s40 = sshll.u32 [#allocation7], 4
      %s41 = int_to_ptr.vmem [resolvable:$true] %s40
      %46 = dma.hbm_to_vmem [thread:$0]  %s2, 6144, %s41, [#allocation6], 64, 64, 4
    $region13: #{tpu_custom_call.1} parent=1 // pred_fallthru
      _
    // Predicated region
    $region14: #{tpu_custom_call.1} parent=1 // pred_check
      _
    $region15: #{tpu_custom_call.1} parent=1 // pred_check_branch
      %48 = sbr.rel (0) target = $region17
    $region16: #{tpu_custom_call.1} parent=1 // pred_region
      %s50 = ssub.s32 128, 128
      %51 = vsyncadd [#allocation9], %s50
      %s53 = sshll.u32 [#allocation8], 4
      %s54 = int_to_ptr.vmem [resolvable:$true] %s53
      %56 = dma.hbm_to_vmem [thread:$0]  %s3, 128, %s54, [#allocation9]
    $region17: #{tpu_custom_call.1} parent=1 // pred_fallthru
      _
    // Predicated region
    $region18: #{tpu_custom_call.1} parent=1 // pred_check
      _
    $region19: #{tpu_custom_call.1} parent=1 // pred_check_branch
      %58 = sbr.rel (0) target = $region21
    $region20: #{tpu_custom_call.1} parent=1 // pred_region
      %59 = dma.done [#allocation3], 256
    $region21: #{tpu_custom_call.1} parent=1 // pred_fallthru
      _
    // Predicated region
    $region22: #{tpu_custom_call.1} parent=1 // pred_check
      _
    $region23: #{tpu_custom_call.1} parent=1 // pred_check_branch
      %61 = sbr.rel (0) target = $region25
    $region24: #{tpu_custom_call.1} parent=1 // pred_region
      %62 = dma.done [#allocation6], 32
    $region25: #{tpu_custom_call.1} parent=1 // pred_fallthru
      _
    // Predicated region
    $region26: #{tpu_custom_call.1} parent=1 // pred_check
      _
    $region27: #{tpu_custom_call.1} parent=1 // pred_check_branch
      %64 = sbr.rel (0) target = $region29
    $region28: #{tpu_custom_call.1} parent=1 // pred_region
      %65 = dma.done [#allocation6], 6144
    $region29: #{tpu_custom_call.1} parent=1 // pred_fallthru
      _
    // Predicated region
    $region30: #{tpu_custom_call.1} parent=1 // pred_check
      _
    $region31: #{tpu_custom_call.1} parent=1 // pred_check_branch
      %67 = sbr.rel (0) target = $region33
    $region32: #{tpu_custom_call.1} parent=1 // pred_region
      %68 = dma.done [#allocation9], 128
    $region33: #{tpu_custom_call.1} parent=1 // pred_fallthru
      _
    %v70 = vld [vmem:[#allocation2] sm:$0xf]
    %v71 = vld [vmem:[#allocation2 + $0x4] sm:$0xf]
    %v72 = vld [vmem:[#allocation2 + $0x8] sm:$0xf]
    %v73 = vld [vmem:[#allocation2 + $0xc] sm:$0xf]
    %v74 = vld [vmem:[#allocation7] sm:$0xf]
    %v75 = vld [vmem:[#allocation7 + $0x4] sm:$0xf]
    %v76 = vld [vmem:[#allocation7 + $0x8] sm:$0xf]
    %v77 = vld [vmem:[#allocation7 + $0xc] sm:$0xf]
    %v78 = vld [vmem:[#allocation7 + $0x10] sm:$0xf]
    %v79 = vld [vmem:[#allocation7 + $0x14] sm:$0xf]
    %v80 = vld [vmem:[#allocation7 + $0x18] sm:$0xf]
    %v81 = vld [vmem:[#allocation7 + $0x1c] sm:$0xf]
    %v82 = vld [vmem:[#allocation7 + $0x20] sm:$0xf]
    %v83 = vld [vmem:[#allocation7 + $0x24] sm:$0xf]
    %v84 = vld [vmem:[#allocation7 + $0x28] sm:$0xf]
    %v85 = vld [vmem:[#allocation7 + $0x2c] sm:$0xf]
    %v86 = vld [vmem:[#allocation7 + $0x30] sm:$0xf]
    %v87 = vld [vmem:[#allocation7 + $0x34] sm:$0xf]
    %v88 = vld [vmem:[#allocation7 + $0x38] sm:$0xf]
    %v89 = vld [vmem:[#allocation7 + $0x3c] sm:$0xf]
    %v90 = vld [vmem:[#allocation8] sm:$0x1]
    %v91 = vlaneseq
    %v92 = vshrl.u32 %v91, 7
    %v93 = vsub.s32 0, %v92
    %v94 = vrot.slane %v90, %v93
    %v99 = vunpack.c.l.b16 %v70
    %v100 = vunpack.c.l.b16 %v71
    %v101 = vunpack.c.l.b16 %v72
    %v102 = vunpack.c.l.b16 %v73
    %v103 = vpack.c.b16 %v100, %v99
    %v104 = vpack.c.b16 %v102, %v101
    %v123 = vunpack.c.l.b16 %v74
    %v124 = vunpack.c.l.b16 %v75
    %v125 = vunpack.c.l.b16 %v76
    %v126 = vunpack.c.l.b16 %v77
    %v127 = vunpack.c.l.b16 %v78
    %v128 = vunpack.c.l.b16 %v79
    %v129 = vunpack.c.l.b16 %v80
    %v130 = vunpack.c.l.b16 %v81
    %v131 = vunpack.c.l.b16 %v82
    %v132 = vunpack.c.l.b16 %v83
    %v133 = vunpack.c.l.b16 %v84
    %v134 = vunpack.c.l.b16 %v85
    %v135 = vunpack.c.l.b16 %v86
    %v136 = vunpack.c.l.b16 %v87
    %v137 = vunpack.c.l.b16 %v88
    %v138 = vunpack.c.l.b16 %v89
    %v139 = vpack.c.b16 %v124, %v123
    %v140 = vpack.c.b16 %v126, %v125
    %v141 = vpack.c.b16 %v128, %v127
    %v142 = vpack.c.b16 %v130, %v129
    %v143 = vpack.c.b16 %v132, %v131
    %v144 = vpack.c.b16 %v134, %v133
    %v145 = vpack.c.b16 %v136, %v135
    %v146 = vpack.c.b16 %v138, %v137
    %155 = vmatprep.subr.bf16.mxu0 0
    %156 = vmatpush1.bf16.msra.mxu0 %v146
    %157 = vmatprep.subr.bf16.mxu0 0
    %158 = vmatpush1.bf16.msra.mxu0 %v145
    %159 = vmatprep.subr.bf16.mxu0 0
    %160 = vmatpush1.bf16.msra.mxu0 %v144
    %161 = vmatprep.subr.bf16.mxu0 0
    %162 = vmatpush1.bf16.msra.mxu0 %v143
    %163 = vmatprep.subr.bf16.mxu0 0
    %164 = vmatpush1.bf16.msra.mxu0 %v142
    %165 = vmatprep.subr.bf16.mxu0 0
    %166 = vmatpush1.bf16.msra.mxu0 %v141
    %167 = vmatprep.subr.bf16.mxu0 0
    %168 = vmatpush1.bf16.msra.mxu0 %v140
    %169 = vmatprep.subr.bf16.mxu0 0
    %170 = vmatpush1.bf16.msra.mxu0 %v139
    %171 = vmatprep.subr.bf16.mxu0 0
    %172 = vmatpush2.bf16.msra.mxu0 0
    %173 = vmatprep.subr.bf16.mxu0 0
    %174 = vmatpush2.bf16.msra.mxu0 0
    %175 = vmatprep.subr.bf16.mxu0 0
    %176 = vmatpush2.bf16.msra.mxu0 0
    %177 = vmatprep.subr.bf16.mxu0 0
    %178 = vmatpush2.bf16.msra.mxu0 0
    %179 = vmatprep.subr.bf16.mxu0 0
    %180 = vmatpush2.bf16.msra.mxu0 0
    %181 = vmatprep.subr.bf16.mxu0 0
    %182 = vmatpush2.bf16.msra.mxu0 0
    %183 = vmatprep.subr.bf16.mxu0 0
    %184 = vmatpush2.bf16.msra.mxu0 0
    %185 = vmatprep.subr.bf16.mxu0 0
    %186 = vmatpush2.bf16.msra.mxu0 0
    %187 = vmatprep.mubr.bf16.mxu0 0
    %188 = vmatmul.mubr.bf16.gmra.mxu0 %v103
    %v189 = vpop.f32.mrf.mxu0
    %v190 = vadd.f32 %v94, %v189
    %v191 = vpop.f32.mrf.mxu0
    %v192 = vpop.f32.mrf.mxu0
    %v193 = vadd.f32 %v94, %v192
    %v194 = vpop.f32.mrf.mxu0
    %195 = vmatprep.mubr.bf16.mxu0 0
    %196 = vmatmul.mubr.bf16.gmra.mxu0 %v104
    %v197 = vpop.f32.mrf.mxu0
    %v198 = vadd.f32 %v94, %v197
    %v199 = vpop.f32.mrf.mxu0
    %v200 = vpop.f32.mrf.mxu0
    %v201 = vadd.f32 %v94, %v200
    %v202 = vpop.f32.mrf.mxu0
    %203 = vdwg.mxu0
    %v204 = vtanh.pop %v190
    %v205 = vtanh.pop %v193
    %v206 = vtanh.pop %v198
    %v207 = vtanh.pop %v201
    %v208 = vpack.c.bf16 %v205, %v204
    %v209 = vpack.c.bf16 %v207, %v206
    %s210 = scalar_lea.vmem [#allocation7], 64
    %v211 = vld [vmem:[%s210] sm:$0xf]
    %v212 = vld [vmem:[%s210 + $0x4] sm:$0xf]
    %v213 = vld [vmem:[%s210 + $0x8] sm:$0xf]
    %v214 = vld [vmem:[%s210 + $0xc] sm:$0xf]
    %v215 = vld [vmem:[%s210 + $0x10] sm:$0xf]
    %v216 = vld [vmem:[%s210 + $0x14] sm:$0xf]
    %v217 = vld [vmem:[%s210 + $0x18] sm:$0xf]
    %v218 = vld [vmem:[%s210 + $0x1c] sm:$0xf]
    %v219 = vld [vmem:[%s210 + $0x20] sm:$0xf]
    %v220 = vld [vmem:[%s210 + $0x24] sm:$0xf]
    %v221 = vld [vmem:[%s210 + $0x28] sm:$0xf]
    %v222 = vld [vmem:[%s210 + $0x2c] sm:$0xf]
    %v223 = vld [vmem:[%s210 + $0x30] sm:$0xf]
    %v224 = vld [vmem:[%s210 + $0x34] sm:$0xf]
    %v225 = vld [vmem:[%s210 + $0x38] sm:$0xf]
    %v226 = vld [vmem:[%s210 + $0x3c] sm:$0xf]
    %v227 = vld [vmem:[#allocation8 + $0x1] sm:$0x1]
    %v228 = vlaneseq
    %v229 = vshrl.u32 %v228, 7
    %v230 = vsub.s32 0, %v229
    %v231 = vrot.slane %v227, %v230
    %v248 = vunpack.c.l.b16 %v211
    %v249 = vunpack.c.l.b16 %v212
    %v250 = vunpack.c.l.b16 %v213
    %v251 = vunpack.c.l.b16 %v214
    %v252 = vunpack.c.l.b16 %v215
    %v253 = vunpack.c.l.b16 %v216
    %v254 = vunpack.c.l.b16 %v217
    %v255 = vunpack.c.l.b16 %v218
    %v256 = vunpack.c.l.b16 %v219
    %v257 = vunpack.c.l.b16 %v220
    %v258 = vunpack.c.l.b16 %v221
    %v259 = vunpack.c.l.b16 %v222
    %v260 = vunpack.c.l.b16 %v223
    %v261 = vunpack.c.l.b16 %v224
    %v262 = vunpack.c.l.b16 %v225
    %v263 = vunpack.c.l.b16 %v226
    %v264 = vpack.c.b16 %v249, %v248
    %v265 = vpack.c.b16 %v251, %v250
    %v266 = vpack.c.b16 %v253, %v252
    %v267 = vpack.c.b16 %v255, %v254
    %v268 = vpack.c.b16 %v257, %v256
    %v269 = vpack.c.b16 %v259, %v258
    %v270 = vpack.c.b16 %v261, %v260
    %v271 = vpack.c.b16 %v263, %v262
    %280 = vmatprep.subr.bf16.mxu0 0
    %281 = vmatpush1.bf16.msra.mxu0 %v271
    %282 = vmatprep.subr.bf16.mxu0 0
    %283 = vmatpush1.bf16.msra.mxu0 %v270
    %284 = vmatprep.subr.bf16.mxu0 0
    %285 = vmatpush1.bf16.msra.mxu0 %v269
    %286 = vmatprep.subr.bf16.mxu0 0
    %287 = vmatpush1.bf16.msra.mxu0 %v268
    %288 = vmatprep.subr.bf16.mxu0 0
    %289 = vmatpush1.bf16.msra.mxu0 %v267
    %290 = vmatprep.subr.bf16.mxu0 0
    %291 = vmatpush1.bf16.msra.mxu0 %v266
    %292 = vmatprep.subr.bf16.mxu0 0
    %293 = vmatpush1.bf16.msra.mxu0 %v265
    %294 = vmatprep.subr.bf16.mxu0 0
    %295 = vmatpush1.bf16.msra.mxu0 %v264
    %296 = vmatprep.subr.bf16.mxu0 0
    %297 = vmatpush2.bf16.msra.mxu0 0
    %298 = vmatprep.subr.bf16.mxu0 0
    %299 = vmatpush2.bf16.msra.mxu0 0
    %300 = vmatprep.subr.bf16.mxu0 0
    %301 = vmatpush2.bf16.msra.mxu0 0
    %302 = vmatprep.subr.bf16.mxu0 0
    %303 = vmatpush2.bf16.msra.mxu0 0
    %304 = vmatprep.subr.bf16.mxu0 0
    %305 = vmatpush2.bf16.msra.mxu0 0
    %306 = vmatprep.subr.bf16.mxu0 0
    %307 = vmatpush2.bf16.msra.mxu0 0
    %308 = vmatprep.subr.bf16.mxu0 0
    %309 = vmatpush2.bf16.msra.mxu0 0
    %310 = vmatprep.subr.bf16.mxu0 0
    %311 = vmatpush2.bf16.msra.mxu0 0
    %312 = vmatprep.mubr.bf16.mxu0 0
    %313 = vmatmul.mubr.bf16.gmra.mxu0 %v208
    %v314 = vpop.f32.mrf.mxu0
    %v315 = vadd.f32 %v231, %v314
    %v316 = vpop.f32.mrf.mxu0
    %v317 = vpop.f32.mrf.mxu0
    %v318 = vadd.f32 %v231, %v317
    %v319 = vpop.f32.mrf.mxu0
    %320 = vmatprep.mubr.bf16.mxu0 0
    %321 = vmatmul.mubr.bf16.gmra.mxu0 %v209
    %v322 = vpop.f32.mrf.mxu0
    %v323 = vadd.f32 %v231, %v322
    %v324 = vpop.f32.mrf.mxu0
    %v325 = vpop.f32.mrf.mxu0
    %v326 = vadd.f32 %v231, %v325
    %v327 = vpop.f32.mrf.mxu0
    %328 = vdwg.mxu0
    %v329 = vtanh.pop %v315
    %v330 = vtanh.pop %v318
    %v331 = vtanh.pop %v323
    %v332 = vtanh.pop %v326
    %v333 = vpack.c.bf16 %v330, %v329
    %v334 = vpack.c.bf16 %v332, %v331
    %s335 = scalar_lea.vmem [#allocation7], 128
    %v336 = vld [vmem:[%s335] sm:$0xf]
    %v337 = vld [vmem:[%s335 + $0x4] sm:$0xf]
    %v338 = vld [vmem:[%s335 + $0x8] sm:$0xf]
    %v339 = vld [vmem:[%s335 + $0xc] sm:$0xf]
    %v340 = vld [vmem:[%s335 + $0x10] sm:$0xf]
    %v341 = vld [vmem:[%s335 + $0x14] sm:$0xf]
    %v342 = vld [vmem:[%s335 + $0x18] sm:$0xf]
    %v343 = vld [vmem:[%s335 + $0x1c] sm:$0xf]
    %v344 = vld [vmem:[%s335 + $0x20] sm:$0xf]
    %v345 = vld [vmem:[%s335 + $0x24] sm:$0xf]
    %v346 = vld [vmem:[%s335 + $0x28] sm:$0xf]
    %v347 = vld [vmem:[%s335 + $0x2c] sm:$0xf]
    %v348 = vld [vmem:[%s335 + $0x30] sm:$0xf]
    %v349 = vld [vmem:[%s335 + $0x34] sm:$0xf]
    %v350 = vld [vmem:[%s335 + $0x38] sm:$0xf]
    %v351 = vld [vmem:[%s335 + $0x3c] sm:$0xf]
    %v352 = vld [vmem:[#allocation8 + $0x2] sm:$0x1]
    %v353 = vlaneseq
    %v354 = vshrl.u32 %v353, 7
    %v355 = vsub.s32 0, %v354
    %v356 = vrot.slane %v352, %v355
    %v373 = vunpack.c.l.b16 %v336
    %v374 = vunpack.c.l.b16 %v337
    %v375 = vunpack.c.l.b16 %v338
    %v376 = vunpack.c.l.b16 %v339
    %v377 = vunpack.c.l.b16 %v340
    %v378 = vunpack.c.l.b16 %v341
    %v379 = vunpack.c.l.b16 %v342
    %v380 = vunpack.c.l.b16 %v343
    %v381 = vunpack.c.l.b16 %v344
    %v382 = vunpack.c.l.b16 %v345
    %v383 = vunpack.c.l.b16 %v346
    %v384 = vunpack.c.l.b16 %v347
    %v385 = vunpack.c.l.b16 %v348
    %v386 = vunpack.c.l.b16 %v349
    %v387 = vunpack.c.l.b16 %v350
    %v388 = vunpack.c.l.b16 %v351
    %v389 = vpack.c.b16 %v374, %v373
    %v390 = vpack.c.b16 %v376, %v375
    %v391 = vpack.c.b16 %v378, %v377
    %v392 = vpack.c.b16 %v380, %v379
    %v393 = vpack.c.b16 %v382, %v381
    %v394 = vpack.c.b16 %v384, %v383
    %v395 = vpack.c.b16 %v386, %v385
    %v396 = vpack.c.b16 %v388, %v387
    %405 = vmatprep.subr.bf16.mxu0 0
    %406 = vmatpush1.bf16.msra.mxu0 %v396
    %407 = vmatprep.subr.bf16.mxu0 0
    %408 = vmatpush1.bf16.msra.mxu0 %v395
    %409 = vmatprep.subr.bf16.mxu0 0
    %410 = vmatpush1.bf16.msra.mxu0 %v394
    %411 = vmatprep.subr.bf16.mxu0 0
    %412 = vmatpush1.bf16.msra.mxu0 %v393
    %413 = vmatprep.subr.bf16.mxu0 0
    %414 = vmatpush1.bf16.msra.mxu0 %v392
    %415 = vmatprep.subr.bf16.mxu0 0
    %416 = vmatpush1.bf16.msra.mxu0 %v391
    %417 = vmatprep.subr.bf16.mxu0 0
    %418 = vmatpush1.bf16.msra.mxu0 %v390
    %419 = vmatprep.subr.bf16.mxu0 0
    %420 = vmatpush1.bf16.msra.mxu0 %v389
    %421 = vmatprep.subr.bf16.mxu0 0
    %422 = vmatpush2.bf16.msra.mxu0 0
    %423 = vmatprep.subr.bf16.mxu0 0
    %424 = vmatpush2.bf16.msra.mxu0 0
    %425 = vmatprep.subr.bf16.mxu0 0
    %426 = vmatpush2.bf16.msra.mxu0 0
    %427 = vmatprep.subr.bf16.mxu0 0
    %428 = vmatpush2.bf16.msra.mxu0 0
    %429 = vmatprep.subr.bf16.mxu0 0
    %430 = vmatpush2.bf16.msra.mxu0 0
    %431 = vmatprep.subr.bf16.mxu0 0
    %432 = vmatpush2.bf16.msra.mxu0 0
    %433 = vmatprep.subr.bf16.mxu0 0
    %434 = vmatpush2.bf16.msra.mxu0 0
    %435 = vmatprep.subr.bf16.mxu0 0
    %436 = vmatpush2.bf16.msra.mxu0 0
    %437 = vmatprep.mubr.bf16.mxu0 0
    %438 = vmatmul.mubr.bf16.gmra.mxu0 %v333
    %v439 = vpop.f32.mrf.mxu0
    %v440 = vadd.f32 %v356, %v439
    %v441 = vpop.f32.mrf.mxu0
    %v442 = vpop.f32.mrf.mxu0
    %v443 = vadd.f32 %v356, %v442
    %v444 = vpop.f32.mrf.mxu0
    %445 = vmatprep.mubr.bf16.mxu0 0
    %446 = vmatmul.mubr.bf16.gmra.mxu0 %v334
    %v447 = vpop.f32.mrf.mxu0
    %v448 = vadd.f32 %v356, %v447
    %v449 = vpop.f32.mrf.mxu0
    %v450 = vpop.f32.mrf.mxu0
    %v451 = vadd.f32 %v356, %v450
    %v452 = vpop.f32.mrf.mxu0
    %453 = vdwg.mxu0
    %v454 = vld [vmem:[#allocation5] sm:$0x3]
    %v455 = vpack.c.bf16 %v443, %v440
    %v456 = vpack.c.bf16 %v451, %v448
    %vm457 = vcmask 261120
    %v459 = vsel %vm457, %v454, 0
    %461 = vmatprep.subr.bf16.mxu0 0
    %462 = vmatpush1.bf16.msra.mxu0 0
    %463 = vmatprep.subr.bf16.mxu0 0
    %464 = vmatpush1.bf16.msra.mxu0 0
    %465 = vmatprep.subr.bf16.mxu0 0
    %466 = vmatpush1.bf16.msra.mxu0 0
    %467 = vmatprep.subr.bf16.mxu0 0
    %468 = vmatpush1.bf16.msra.mxu0 0
    %469 = vmatprep.subr.bf16.mxu0 0
    %470 = vmatpush1.bf16.msra.mxu0 0
    %471 = vmatprep.subr.bf16.mxu0 0
    %472 = vmatpush1.bf16.msra.mxu0 0
    %473 = vmatprep.subr.bf16.mxu0 0
    %474 = vmatpush1.bf16.msra.mxu0 %v456
    %475 = vmatprep.subr.bf16.mxu0 0
    %476 = vmatpush1.bf16.msra.mxu0 %v455
    %477 = vmatprep.subr.bf16.mxu0 0
    %478 = vmatpush2.bf16.msra.mxu0 0
    %479 = vmatprep.subr.bf16.mxu0 0
    %480 = vmatpush2.bf16.msra.mxu0 0
    %481 = vmatprep.subr.bf16.mxu0 0
    %482 = vmatpush2.bf16.msra.mxu0 0
    %483 = vmatprep.subr.bf16.mxu0 0
    %484 = vmatpush2.bf16.msra.mxu0 0
    %485 = vmatprep.subr.bf16.mxu0 0
    %486 = vmatpush2.bf16.msra.mxu0 0
    %487 = vmatprep.subr.bf16.mxu0 0
    %488 = vmatpush2.bf16.msra.mxu0 0
    %489 = vmatprep.subr.bf16.mxu0 0
    %490 = vmatpush2.bf16.msra.mxu0 0
    %491 = vmatprep.subr.bf16.mxu0 0
    %492 = vmatpush2.bf16.msra.mxu0 0
    %493 = vmatprep.mubr.bf16.mxu0 0
    %494 = vmatmul.mubr.bf16.gmra.mxu0 %v459
    %v495 = vpop.f32.mrf.mxu0
    %v496 = vadd.f32 0.0, %v495
    %v497 = vpop.f32.mrf.mxu0
    %v498 = vpop.f32.mrf.mxu0
    %v499 = vpop.f32.mrf.mxu0
    %500 = vdwg.mxu0
    %vm501 = vcmask 1043456
    %v502 = vsel %vm501, %v496, 0.0
    %v503 = vrot.slane %v502, 4
    %v504 = vadd.f32 %v502, %v503
    %v505 = vrot.slane %v504, 2
    %v506 = vadd.f32 %v504, %v505
    %v507 = vrot.slane %v506, 1
    %v508 = vadd.f32 %v506, %v507
    %v509 = vrcp.pop 4.0
    %v510 = vmul.f32 %v508, %v509
    %v511 = vsub.f32 %v496, %v510
    %v512 = vmul.f32 %v511, %v511
    %v513 = vsel %vm501, %v512, 0.0
    %v514 = vrot.slane %v513, 4
    %v515 = vadd.f32 %v513, %v514
    %v516 = vrot.slane %v515, 2
    %v517 = vadd.f32 %v515, %v516
    %v518 = vrot.slane %v517, 1
    %v519 = vadd.f32 %v517, %v518
    %v520 = vmul.f32 %v519, %v509
    %v521 = vadd.f32 %v520, 1e-05
    %v522 = vrsqrt.pop %v521
    %v523 = vmul.f32 %v511, %v522
    %v524 = vld [vmem:[#allocation8 + $0x6] sm:$0x1]
    %v525 = vlaneseq
    %v526 = vshrl.u32 %v525, 7
    %v527 = vsub.s32 0, %v526
    %v528 = vrot.slane %v524, %v527
    %v529 = vmul.f32 %v523, %v528
    %v530 = vld [vmem:[#allocation8 + $0x7] sm:$0x1]
    %v531 = vlaneseq
    %v532 = vshrl.u32 %v531, 7
    %v533 = vsub.s32 0, %v532
    %v534 = vrot.slane %v530, %v533
    %v535 = vadd.f32 %v529, %v534
    %v536 = vpack.c.bf16 %v535, %v535
    %s537 = scalar_lea.vmem [#allocation7], 192
    %v538 = vld [vmem:[%s537] sm:$0xf]
    %v539 = vld [vmem:[%s537 + $0x4] sm:$0xf]
    %v540 = vld [vmem:[%s537 + $0x8] sm:$0xf]
    %v541 = vld [vmem:[%s537 + $0xc] sm:$0xf]
    %v542 = vld [vmem:[%s537 + $0x10] sm:$0xf]
    %v543 = vld [vmem:[%s537 + $0x14] sm:$0xf]
    %v544 = vld [vmem:[%s537 + $0x18] sm:$0xf]
    %v545 = vld [vmem:[%s537 + $0x1c] sm:$0xf]
    %v546 = vld [vmem:[%s537 + $0x20] sm:$0xf]
    %v547 = vld [vmem:[%s537 + $0x24] sm:$0xf]
    %v548 = vld [vmem:[%s537 + $0x28] sm:$0xf]
    %v549 = vld [vmem:[%s537 + $0x2c] sm:$0xf]
    %v550 = vld [vmem:[%s537 + $0x30] sm:$0xf]
    %v551 = vld [vmem:[%s537 + $0x34] sm:$0xf]
    %v552 = vld [vmem:[%s537 + $0x38] sm:$0xf]
    %v553 = vld [vmem:[%s537 + $0x3c] sm:$0xf]
    %v554 = vld [vmem:[#allocation8 + $0x3] sm:$0x1]
    %v555 = vlaneseq
    %v556 = vshrl.u32 %v555, 7
    %v557 = vsub.s32 0, %v556
    %v558 = vrot.slane %v554, %v557
    %v575 = vunpack.c.l.b16 %v538
    %v576 = vunpack.c.l.b16 %v539
    %v577 = vunpack.c.l.b16 %v540
    %v578 = vunpack.c.l.b16 %v541
    %v579 = vunpack.c.l.b16 %v542
    %v580 = vunpack.c.l.b16 %v543
    %v581 = vunpack.c.l.b16 %v544
    %v582 = vunpack.c.l.b16 %v545
    %v583 = vunpack.c.l.b16 %v546
    %v584 = vunpack.c.l.b16 %v547
    %v585 = vunpack.c.l.b16 %v548
    %v586 = vunpack.c.l.b16 %v549
    %v587 = vunpack.c.l.b16 %v550
    %v588 = vunpack.c.l.b16 %v551
    %v589 = vunpack.c.l.b16 %v552
    %v590 = vunpack.c.l.b16 %v553
    %v591 = vpack.c.b16 %v576, %v575
    %v592 = vpack.c.b16 %v578, %v577
    %v593 = vpack.c.b16 %v580, %v579
    %v594 = vpack.c.b16 %v582, %v581
    %v595 = vpack.c.b16 %v584, %v583
    %v596 = vpack.c.b16 %v586, %v585
    %v597 = vpack.c.b16 %v588, %v587
    %v598 = vpack.c.b16 %v590, %v589
    %607 = vmatprep.subr.bf16.mxu0 0
    %608 = vmatpush1.bf16.msra.mxu0 %v598
    %609 = vmatprep.subr.bf16.mxu0 0
    %610 = vmatpush1.bf16.msra.mxu0 %v597
    %611 = vmatprep.subr.bf16.mxu0 0
    %612 = vmatpush1.bf16.msra.mxu0 %v596
    %613 = vmatprep.subr.bf16.mxu0 0
    %614 = vmatpush1.bf16.msra.mxu0 %v595
    %615 = vmatprep.subr.bf16.mxu0 0
    %616 = vmatpush1.bf16.msra.mxu0 %v594
    %617 = vmatprep.subr.bf16.mxu0 0
    %618 = vmatpush1.bf16.msra.mxu0 %v593
    %619 = vmatprep.subr.bf16.mxu0 0
    %620 = vmatpush1.bf16.msra.mxu0 %v592
    %621 = vmatprep.subr.bf16.mxu0 0
    %622 = vmatpush1.bf16.msra.mxu0 %v591
    %623 = vmatprep.subr.bf16.mxu0 0
    %624 = vmatpush2.bf16.msra.mxu0 0
    %625 = vmatprep.subr.bf16.mxu0 0
    %626 = vmatpush2.bf16.msra.mxu0 0
    %627 = vmatprep.subr.bf16.mxu0 0
    %628 = vmatpush2.bf16.msra.mxu0 0
    %629 = vmatprep.subr.bf16.mxu0 0
    %630 = vmatpush2.bf16.msra.mxu0 0
    %631 = vmatprep.subr.bf16.mxu0 0
    %632 = vmatpush2.bf16.msra.mxu0 0
    %633 = vmatprep.subr.bf16.mxu0 0
    %634 = vmatpush2.bf16.msra.mxu0 0
    %635 = vmatprep.subr.bf16.mxu0 0
    %636 = vmatpush2.bf16.msra.mxu0 0
    %637 = vmatprep.subr.bf16.mxu0 0
    %638 = vmatpush2.bf16.msra.mxu0 0
    %639 = vmatprep.mubr.bf16.mxu0 0
    %640 = vmatmul.mubr.bf16.gmra.mxu0 %v536
    %v641 = vpop.f32.mrf.mxu0
    %v642 = vadd.f32 %v558, %v641
    %v643 = vpop.f32.mrf.mxu0
    %v644 = vpop.f32.mrf.mxu0
    %v645 = vpop.f32.mrf.mxu0
    %646 = vdwg.mxu0
    %v647 = vtanh.pop %v642
    %v648 = vpack.c.bf16 %v647, %v647
    %s649 = scalar_lea.vmem [#allocation7], 256
    %v650 = vld [vmem:[%s649] sm:$0xf]
    %v651 = vld [vmem:[%s649 + $0x4] sm:$0xf]
    %v652 = vld [vmem:[%s649 + $0x8] sm:$0xf]
    %v653 = vld [vmem:[%s649 + $0xc] sm:$0xf]
    %v654 = vld [vmem:[%s649 + $0x10] sm:$0xf]
    %v655 = vld [vmem:[%s649 + $0x14] sm:$0xf]
    %v656 = vld [vmem:[%s649 + $0x18] sm:$0xf]
    %v657 = vld [vmem:[%s649 + $0x1c] sm:$0xf]
    %v658 = vld [vmem:[%s649 + $0x20] sm:$0xf]
    %v659 = vld [vmem:[%s649 + $0x24] sm:$0xf]
    %v660 = vld [vmem:[%s649 + $0x28] sm:$0xf]
    %v661 = vld [vmem:[%s649 + $0x2c] sm:$0xf]
    %v662 = vld [vmem:[%s649 + $0x30] sm:$0xf]
    %v663 = vld [vmem:[%s649 + $0x34] sm:$0xf]
    %v664 = vld [vmem:[%s649 + $0x38] sm:$0xf]
    %v665 = vld [vmem:[%s649 + $0x3c] sm:$0xf]
    %v666 = vld [vmem:[#allocation8 + $0x4] sm:$0x1]
    %v667 = vlaneseq
    %v668 = vshrl.u32 %v667, 7
    %v669 = vsub.s32 0, %v668
    %v670 = vrot.slane %v666, %v669
    %v687 = vunpack.c.l.b16 %v650
    %v688 = vunpack.c.l.b16 %v651
    %v689 = vunpack.c.l.b16 %v652
    %v690 = vunpack.c.l.b16 %v653
    %v691 = vunpack.c.l.b16 %v654
    %v692 = vunpack.c.l.b16 %v655
    %v693 = vunpack.c.l.b16 %v656
    %v694 = vunpack.c.l.b16 %v657
    %v695 = vunpack.c.l.b16 %v658
    %v696 = vunpack.c.l.b16 %v659
    %v697 = vunpack.c.l.b16 %v660
    %v698 = vunpack.c.l.b16 %v661
    %v699 = vunpack.c.l.b16 %v662
    %v700 = vunpack.c.l.b16 %v663
    %v701 = vunpack.c.l.b16 %v664
    %v702 = vunpack.c.l.b16 %v665
    %v703 = vpack.c.b16 %v688, %v687
    %v704 = vpack.c.b16 %v690, %v689
    %v705 = vpack.c.b16 %v692, %v691
    %v706 = vpack.c.b16 %v694, %v693
    %v707 = vpack.c.b16 %v696, %v695
    %v708 = vpack.c.b16 %v698, %v697
    %v709 = vpack.c.b16 %v700, %v699
    %v710 = vpack.c.b16 %v702, %v701
    %719 = vmatprep.subr.bf16.mxu0 0
    %720 = vmatpush1.bf16.msra.mxu0 %v710
    %721 = vmatprep.subr.bf16.mxu0 0
    %722 = vmatpush1.bf16.msra.mxu0 %v709
    %723 = vmatprep.subr.bf16.mxu0 0
    %724 = vmatpush1.bf16.msra.mxu0 %v708
    %725 = vmatprep.subr.bf16.mxu0 0
    %726 = vmatpush1.bf16.msra.mxu0 %v707
    %727 = vmatprep.subr.bf16.mxu0 0
    %728 = vmatpush1.bf16.msra.mxu0 %v706
    %729 = vmatprep.subr.bf16.mxu0 0
    %730 = vmatpush1.bf16.msra.mxu0 %v705
    %731 = vmatprep.subr.bf16.mxu0 0
    %732 = vmatpush1.bf16.msra.mxu0 %v704
    %733 = vmatprep.subr.bf16.mxu0 0
    %734 = vmatpush1.bf16.msra.mxu0 %v703
    %735 = vmatprep.subr.bf16.mxu0 0
    %736 = vmatpush2.bf16.msra.mxu0 0
    %737 = vmatprep.subr.bf16.mxu0 0
    %738 = vmatpush2.bf16.msra.mxu0 0
    %739 = vmatprep.subr.bf16.mxu0 0
    %740 = vmatpush2.bf16.msra.mxu0 0
    %741 = vmatprep.subr.bf16.mxu0 0
    %742 = vmatpush2.bf16.msra.mxu0 0
    %743 = vmatprep.subr.bf16.mxu0 0
    %744 = vmatpush2.bf16.msra.mxu0 0
    %745 = vmatprep.subr.bf16.mxu0 0
    %746 = vmatpush2.bf16.msra.mxu0 0
    %747 = vmatprep.subr.bf16.mxu0 0
    %748 = vmatpush2.bf16.msra.mxu0 0
    %749 = vmatprep.subr.bf16.mxu0 0
    %750 = vmatpush2.bf16.msra.mxu0 0
    %751 = vmatprep.mubr.bf16.mxu0 0
    %752 = vmatmul.mubr.bf16.gmra.mxu0 %v648
    %v753 = vpop.f32.mrf.mxu0
    %v754 = vadd.f32 %v670, %v753
    %v755 = vpop.f32.mrf.mxu0
    %v756 = vpop.f32.mrf.mxu0
    %v757 = vpop.f32.mrf.mxu0
    %758 = vdwg.mxu0
    %v759 = vtanh.pop %v754
    %v760 = vpack.c.bf16 %v759, %v759
    %s761 = scalar_lea.vmem [#allocation7], 320
    %v762 = vld [vmem:[%s761] sm:$0xf]
    %v763 = vld [vmem:[%s761 + $0x4] sm:$0xf]
    %v764 = vld [vmem:[%s761 + $0x8] sm:$0xf]
    %v765 = vld [vmem:[%s761 + $0xc] sm:$0xf]
    %v766 = vld [vmem:[%s761 + $0x10] sm:$0xf]
    %v767 = vld [vmem:[%s761 + $0x14] sm:$0xf]
    %v768 = vld [vmem:[%s761 + $0x18] sm:$0xf]
    %v769 = vld [vmem:[%s761 + $0x1c] sm:$0xf]
    %v770 = vld [vmem:[%s761 + $0x20] sm:$0xf]
    %v771 = vld [vmem:[%s761 + $0x24] sm:$0xf]
    %v772 = vld [vmem:[%s761 + $0x28] sm:$0xf]
    %v773 = vld [vmem:[%s761 + $0x2c] sm:$0xf]
    %v774 = vld [vmem:[%s761 + $0x30] sm:$0xf]
    %v775 = vld [vmem:[%s761 + $0x34] sm:$0xf]
    %v776 = vld [vmem:[%s761 + $0x38] sm:$0xf]
    %v777 = vld [vmem:[%s761 + $0x3c] sm:$0xf]
    %v778 = vld [vmem:[#allocation8 + $0x5] sm:$0x1]
    %v779 = vlaneseq
    %v780 = vshrl.u32 %v779, 7
    %v781 = vsub.s32 0, %v780
    %v782 = vrot.slane %v778, %v781
    %v799 = vunpack.c.l.b16 %v762
    %v800 = vunpack.c.l.b16 %v763
    %v801 = vunpack.c.l.b16 %v764
    %v802 = vunpack.c.l.b16 %v765
    %v803 = vunpack.c.l.b16 %v766
    %v804 = vunpack.c.l.b16 %v767
    %v805 = vunpack.c.l.b16 %v768
    %v806 = vunpack.c.l.b16 %v769
    %v807 = vunpack.c.l.b16 %v770
    %v808 = vunpack.c.l.b16 %v771
    %v809 = vunpack.c.l.b16 %v772
    %v810 = vunpack.c.l.b16 %v773
    %v811 = vunpack.c.l.b16 %v774
    %v812 = vunpack.c.l.b16 %v775
    %v813 = vunpack.c.l.b16 %v776
    %v814 = vunpack.c.l.b16 %v777
    %v815 = vpack.c.b16 %v800, %v799
    %v816 = vpack.c.b16 %v802, %v801
    %v817 = vpack.c.b16 %v804, %v803
    %v818 = vpack.c.b16 %v806, %v805
    %v819 = vpack.c.b16 %v808, %v807
    %v820 = vpack.c.b16 %v810, %v809
    %v821 = vpack.c.b16 %v812, %v811
    %v822 = vpack.c.b16 %v814, %v813
    %831 = vmatprep.subr.bf16.mxu0 0
    %832 = vmatpush1.bf16.msra.mxu0 %v822
    %833 = vmatprep.subr.bf16.mxu0 0
    %834 = vmatpush1.bf16.msra.mxu0 %v821
    %835 = vmatprep.subr.bf16.mxu0 0
    %836 = vmatpush1.bf16.msra.mxu0 %v820
    %837 = vmatprep.subr.bf16.mxu0 0
    %838 = vmatpush1.bf16.msra.mxu0 %v819
    %839 = vmatprep.subr.bf16.mxu0 0
    %840 = vmatpush1.bf16.msra.mxu0 %v818
    %841 = vmatprep.subr.bf16.mxu0 0
    %842 = vmatpush1.bf16.msra.mxu0 %v817
    %843 = vmatprep.subr.bf16.mxu0 0
    %844 = vmatpush1.bf16.msra.mxu0 %v816
    %845 = vmatprep.subr.bf16.mxu0 0
    %846 = vmatpush1.bf16.msra.mxu0 %v815
    %847 = vmatprep.subr.bf16.mxu0 0
    %848 = vmatpush2.bf16.msra.mxu0 0
    %849 = vmatprep.subr.bf16.mxu0 0
    %850 = vmatpush2.bf16.msra.mxu0 0
    %851 = vmatprep.subr.bf16.mxu0 0
    %852 = vmatpush2.bf16.msra.mxu0 0
    %853 = vmatprep.subr.bf16.mxu0 0
    %854 = vmatpush2.bf16.msra.mxu0 0
    %855 = vmatprep.subr.bf16.mxu0 0
    %856 = vmatpush2.bf16.msra.mxu0 0
    %857 = vmatprep.subr.bf16.mxu0 0
    %858 = vmatpush2.bf16.msra.mxu0 0
    %859 = vmatprep.subr.bf16.mxu0 0
    %860 = vmatpush2.bf16.msra.mxu0 0
    %861 = vmatprep.subr.bf16.mxu0 0
    %862 = vmatpush2.bf16.msra.mxu0 0
    %863 = vmatprep.mubr.bf16.mxu0 0
    %864 = vmatmul.mubr.bf16.gmra.mxu0 %v760
    %v865 = vpop.f32.mrf.mxu0
    %v866 = vadd.f32 %v782, %v865
    %v867 = vpop.f32.mrf.mxu0
    %v868 = vpop.f32.mrf.mxu0
    %v869 = vpop.f32.mrf.mxu0
    %870 = vdwg.mxu0
    %871 = vst [vmem:[#allocation10] sm:$0xf] %v866
    // Predicated region
    $region34: #{tpu_custom_call.1} parent=1 // pred_check
      _
    $region35: #{tpu_custom_call.1} parent=1 // pred_check_branch
      %873 = sbr.rel (0) target = $region37
    $region36: #{tpu_custom_call.1} parent=1 // pred_region
      %s875 = ssub.s32 64, 64
      %876 = vsyncadd [#allocation4], %s875
      %s878 = sshll.u32 [#allocation10], 4
      %s879 = int_to_ptr.vmem [resolvable:$true] %s878
      %881 = dma.vmem_to_hbm [thread:$0]  %s879, 64, %s4, [#allocation4]
    $region37: #{tpu_custom_call.1} parent=1 // pred_fallthru
      _
    // Predicated region
    $region38: #{tpu_custom_call.1} parent=1 // pred_check
      _
    $region39: #{tpu_custom_call.1} parent=1 // pred_check_branch
      %883 = sbr.rel (0) target = $region41
    $region40: #{tpu_custom_call.1} parent=1 // pred_region
      %884 = dma.done [#allocation4], 64
    $region41: #{tpu_custom_call.1} parent=1 // pred_fallthru
      _
    %885 = vsyncpa [#allocation3], 1
    %886 = vsyncpa [#allocation6], 1
    %887 = vsyncpa [#allocation9], 1
    %888 = vsyncpa [#allocation4], 1

</llo_original>
